<compile_context>
chip_gen: v5e
topology: v5e:2x2
jax: 0.10.0
libtpu: 0.0.40
codegen_flags: <defaults>
</compile_context>

<pallas_src>
import functools

import jax
import jax.numpy as jnp
from jax.experimental import pallas as pl
from jax.experimental.pallas import tpu as pltpu

# ---------------- configuration (small, deterministic) ----------------
BATCH = 8
INPUT_SIZE = 32
HIDDEN_SIZE = 64
NUM_CLASSES = 4
NUM_RESIDUALS = 2
BN_EPS = 1e-5
L2_EPS = 1e-12      # torch.nn.functional.normalize default eps
_LANES = 128        # TPU lane width


# ---------------- Pallas kernel ----------------
def _fusion_classifier_kernel(
    D, H, C, R, V,
    # inputs
    fusion_ref,      # [B, D]        activations
    p_ref,           # [V+2D+H, 128] packed params (see layout above)
    # output
    out_ref,         # [3B, 128] packed: rows [0:B)=feats, [B:2B)=logits, [2B:3B) lane0 = preds
):
    B = fusion_ref.shape[0]
    fusion = fusion_ref[...].astype(jnp.float32)                      # [B, D]

    # ---- features = F.normalize(fusion_emb, p=2, dim=-1) ----
    # 1/max(||x||, eps) == rsqrt(max(||x||^2, eps^2));  rsqrt runs on the EUP.
    sq = jnp.sum(fusion * fusion, axis=-1, keepdims=True)             # [B, 1]
    inv_norm = jax.lax.rsqrt(jnp.maximum(sq, jnp.float32(L2_EPS * L2_EPS)))
    feats = fusion * inv_norm                                         # [B, D]

    # ---- input BatchNorm1d (pre-folded to scale/shift) ----
    in_scale = p_ref[0:1, 0:D]                                        # [1, D]
    in_shift = p_ref[1:2, 0:D]                                        # [1, D]
    x = fusion * in_scale + in_shift

    # ---- residual blocks (BN folded into Linears; dropout = identity in eval) ----
    w1_base = V + D
    w2_base = V + 2 * D
    for r in range(R):
        b1 = p_ref[2 + r:3 + r, 0:H]                                  # [1, H]
        b2 = p_ref[2 + R + r:3 + R + r, 0:D]                          # [1, D]
        w1 = p_ref[w1_base:w1_base + D, r * H:(r + 1) * H]            # [D, H]
        w2 = p_ref[w2_base:w2_base + H, r * D:(r + 1) * D]            # [H, D]
        h = jnp.dot(x, w1, preferred_element_type=jnp.float32) + b1
        h = jnp.maximum(h, 0.0)                                       # ReLU
        y = jnp.dot(h, w2, preferred_element_type=jnp.float32) + b2
        x = jnp.maximum(x + y, 0.0)                                   # relu(x + block(x))

    # ---- classifier (Wc / bc lane-padded to 128 -> lane-dense logits row) ----
    wc = p_ref[V:V + D, :]                                            # [D, 128]
    bc = p_ref[2 + 2 * R:3 + 2 * R, :]                                # [1, 128] (zeros past C)
    logits_pad = jnp.dot(x, wc, preferred_element_type=jnp.float32) + bc   # [B, 128]

    # ---- argmax directly on logits (softmax dropped: argmax(softmax(z)) == argmax(z)) ----
    col = jax.lax.broadcasted_iota(jnp.int32, logits_pad.shape, 1)    # [B, 128]
    masked = jnp.where(col < C, logits_pad, -jnp.inf)
    is_max = masked == jnp.max(masked, axis=-1, keepdims=True)
    preds = jnp.min(jnp.where(is_max, col, jnp.int32(_LANES)),
                    axis=-1, keepdims=True)                           # first max index, like torch

    # ---- single packed output slab (one writeback DMA) ----
    out_ref[...] = jnp.zeros_like(out_ref)
    out_ref[0:B, 0:D] = feats
    out_ref[B:2 * B, :] = logits_pad                                  # unmasked lane-dense store
    out_ref[2 * B:3 * B, 0:1] = preds.astype(jnp.float32)


# ---------------- one-time parameter preparation (load time, NOT per call) ----------------
def _fold_bn(gamma, beta, mean, var, eps=BN_EPS):
    """Fold BatchNorm1d (eval mode, running stats) into scale/shift."""
    scale = gamma / jnp.sqrt(var + eps)
    shift = beta - mean * scale
    return scale, shift


def prepare_params(params):
    """Fold BNs into the Linears and pack EVERYTHING into a single lane-dense
    [V + 2D + H, 128] f32 slab.  Call once at load time."""
    R, D, H = params["w1"].shape
    C = params["wc"].shape[-1]
    assert D % 8 == 0 and H % 8 == 0, "D and H must be sublane-aligned (multiples of 8)"
    assert R * H <= _LANES and R * D <= _LANES and C <= _LANES and D <= _LANES

    in_scale, in_shift = _fold_bn(params["in_gamma"], params["in_beta"],
                                  params["in_mean"], params["in_var"])
    s1, t1 = _fold_bn(params["bn1_gamma"], params["bn1_beta"],
                      params["bn1_mean"], params["bn1_var"])           # [R, H]
    s2, t2 = _fold_bn(params["bn2_gamma"], params["bn2_beta"],
                      params["bn2_mean"], params["bn2_var"])           # [R, D]

    # BN(xW + b) = x(W*s) + (b*s + t): fold the BN into the Linear.
    w1f = (params["w1"] * s1[:, None, :]).astype(jnp.float32)          # [R, D, H]
    b1f = params["b1"] * s1 + t1                                       # [R, H]
    w2f = (params["w2"] * s2[:, None, :]).astype(jnp.float32)          # [R, H, D]
    b2f = params["b2"] * s2 + t2                                       # [R, D]

    def row(v):
        return jnp.pad(v.astype(jnp.float32), (0, _LANES - v.shape[0]))

    # --- vector rows (scales / shifts / biases), padded up to a multiple of 8 rows ---
    rows = [row(in_scale), row(in_shift)]
    rows += [row(b1f[r]) for r in range(R)]
    rows += [row(b2f[r]) for r in range(R)]
    rows += [row(params["bc"])]
    V = ((len(rows) + 7) // 8) * 8
    rows += [jnp.zeros((_LANES,), jnp.float32)] * (V - len(rows))
    vec_block = jnp.stack(rows, axis=0)                                # [V, 128]

    # --- classifier weight, lane-padded (logits computed lane-dense in kernel) ---
    wc_block = jnp.pad(params["wc"].astype(jnp.float32),
                       ((0, 0), (0, _LANES - C)))                      # [D, 128]

    # --- residual weights packed side-by-side along lanes ---
    w1_block = jnp.transpose(w1f, (1, 0, 2)).reshape(D, R * H)         # [D, R*H]
    w1_block = jnp.pad(w1_block, ((0, 0), (0, _LANES - R * H)))        # [D, 128]
    w2_block = jnp.transpose(w2f, (1, 0, 2)).reshape(H, R * D)         # [H, R*D]
    w2_block = jnp.pad(w2_block, ((0, 0), (0, _LANES - R * D)))        # [H, 128]

    param_slab = jnp.concatenate([vec_block, wc_block, w1_block, w2_block], axis=0)
    return {"param_slab": param_slab, "dims": (D, H, C, R, V)}


# ---------------- forward wrapper ----------------
def fusion_classifier_forward(fused_feats, prepared):
    """fused_feats: dict with 'text_emb', 'audio_emb', 'fusion_emb' ([B, D] f32)."""
    fusion = fused_feats["fusion_emb"]
    B, D = fusion.shape
    Dp, H, C, R, V = prepared["dims"]
    assert D == Dp

    vmem = pl.BlockSpec(memory_space=pltpu.MemorySpace.VMEM)
    kernel = functools.partial(_fusion_classifier_kernel, D, H, C, R, V)

    # Tiny problem (B=8): single invocation, everything VMEM-resident, no grid.
    # 2 input DMAs (activations + packed params) + 1 output DMA.
    # TODO(synk): for large deployment batches, tile the batch axis with a grid
    #             (BlockSpec((TB, D), lambda i: (i, 0)), dimension_semantics=("parallel",)).
    slab = pl.pallas_call(
        kernel,
        out_shape=jax.ShapeDtypeStruct((3 * B, _LANES), jnp.float32),
        in_specs=[vmem, vmem],
        out_specs=vmem,
    )(fusion, prepared["param_slab"])

    feats = slab[0:B, 0:D]
    logits = slab[B:2 * B, 0:C]
    preds = slab[2 * B:3 * B, 0].astype(jnp.int32)

    return {
        "text_embed": fused_feats["text_emb"],
        "audio_embed": fused_feats["audio_emb"],
        "fusion_embed": feats,       # dict-key collision in the PyTorch module: ID entry wins
        "class_preds": preds,
        "fusion_logits": logits,
    }


# ---------------- deterministic parameter / input construction ----------------
def make_params(key, D, H, C, R):
    ks = jax.random.split(key, 16)
    def n(k, shape, scale):
        return scale * jax.random.normal(k, shape, dtype=jnp.float32)
    return {
        # input BatchNorm1d(D)
        "in_gamma": 1.0 + 0.1 * jax.random.normal(ks[0], (D,), jnp.float32),
        "in_beta": n(ks[1], (D,), 0.05),
        "in_mean": n(ks[2], (D,), 0.1),
        "in_var": 1.0 + 0.1 * jax.random.uniform(ks[3], (D,), jnp.float32),
        # residual blocks (stacked along R)
        "w1": n(ks[4], (R, D, H), 1.0 / jnp.sqrt(D)),
        "b1": n(ks[5], (R, H), 0.02),
        "bn1_gamma": 1.0 + 0.1 * jax.random.normal(ks[6], (R, H), jnp.float32),
        "bn1_beta": n(ks[7], (R, H), 0.05),
        "bn1_mean": n(ks[8], (R, H), 0.1),
        "bn1_var": 1.0 + 0.1 * jax.random.uniform(ks[9], (R, H), jnp.float32),
        "w2": n(ks[10], (R, H, D), 1.0 / jnp.sqrt(H)),
        "b2": n(ks[11], (R, D), 0.02),
        "bn2_gamma": 1.0 + 0.1 * jax.random.normal(ks[12], (R, D), jnp.float32),
        "bn2_beta": n(ks[13], (R, D), 0.05),
        "bn2_mean": n(ks[14], (R, D), 0.1),
        "bn2_var": 1.0 + 0.1 * jax.random.uniform(ks[15], (R, D), jnp.float32),
        # classifier
        "wc": n(jax.random.fold_in(key, 100), (D, C), 1.0 / jnp.sqrt(D)),
        "bc": n(jax.random.fold_in(key, 101), (C,), 0.02),
    }


# ---------------- pure-JAX eval-mode reference (for a numeric sanity check) ----------------
def _reference_forward(fusion, params):
    def bn(z, g, b, m, v):
        return (z - m) / jnp.sqrt(v + BN_EPS) * g + b
    x = bn(fusion, params["in_gamma"], params["in_beta"], params["in_mean"], params["in_var"])
    R = params["w1"].shape[0]
    for r in range(R):
        h = x @ params["w1"][r] + params["b1"][r]
        h = bn(h, params["bn1_gamma"][r], params["bn1_beta"][r],
               params["bn1_mean"][r], params["bn1_var"][r])
        h = jnp.maximum(h, 0.0)
        y = h @ params["w2"][r] + params["b2"][r]
        y = bn(y, params["bn2_gamma"][r], params["bn2_beta"][r],
               params["bn2_mean"][r], params["bn2_var"][r])
        x = jnp.maximum(x + y, 0.0)
    logits = x @ params["wc"] + params["bc"]
    norm = jnp.sqrt(jnp.sum(fusion * fusion, axis=-1, keepdims=True))
    feats = fusion / jnp.maximum(norm, L2_EPS)
    return logits, feats


if __name__ == "__main__":
    key = jax.random.PRNGKey(0)
    k_in, k_p = jax.random.split(key)
    kt, ka, kf = jax.random.split(k_in, 3)

    fused_feats = {
        "text_emb": jax.random.normal(kt, (BATCH, INPUT_SIZE), jnp.float32),
        "audio_emb": jax.random.normal(ka, (BATCH, INPUT_SIZE), jnp.float32),
        "fusion_emb": jax.random.normal(kf, (BATCH, INPUT_SIZE), jnp.float32),
    }
    params = make_params(k_p, INPUT_SIZE, HIDDEN_SIZE, NUM_CLASSES, NUM_RESIDUALS)

    prepared = prepare_params(params)          # one-time folding/packing (load time)
    out = fusion_classifier_forward(fused_feats, prepared)
    jax.block_until_ready(out)

    # shape sanity
    assert out["fusion_logits"].shape == (BATCH, NUM_CLASSES)
    assert out["class_preds"].shape == (BATCH,)
    assert out["fusion_embed"].shape == (BATCH, INPUT_SIZE)

    # numeric sanity vs a pure-JAX eval-mode reference (loose tol covers MXU precision modes)
    ref_logits, ref_feats = _reference_forward(fused_feats["fusion_emb"], params)
    assert jnp.allclose(out["fusion_logits"], ref_logits, rtol=1e-2, atol=1e-2)
    assert jnp.allclose(out["fusion_embed"], ref_feats, rtol=1e-2, atol=1e-2)
    assert jnp.array_equal(out["class_preds"], jnp.argmax(out["fusion_logits"], axis=-1))

    print("KERNEL_OK")
</pallas_src>

<mosaic_0001>
module attributes {stable_mosaic.version = 11 : i64} {
  func.func @_fusion_classifier_kernel(%arg0: memref<8x32xf32, #tpu.memory_space<vmem>>, %arg1: memref<136x128xf32, #tpu.memory_space<vmem>>, %arg2: memref<24x128xf32, #tpu.memory_space<vmem>>) attributes {dimension_semantics = [], scalar_prefetch = 0 : i64, scratch_operands = 0 : i64, tpu.core_type = #tpu.core_type<tc>} {
    %c0 = arith.constant 0 : index
    %c0_0 = arith.constant 0 : index
    %0 = vector.load %arg0[%c0, %c0_0] : memref<8x32xf32, #tpu.memory_space<vmem>>, vector<8x32xf32>
    %1 = arith.mulf %0, %0 : vector<8x32xf32>
    %cst = arith.constant dense<0.000000e+00> : vector<8xf32>
    %2 = vector.multi_reduction <add>, %1, %cst [1] : vector<8x32xf32> to vector<8xf32>
    %3 = vector.shape_cast %2 : vector<8xf32> to vector<8x1xf32>
    %cst_1 = arith.constant 1.000000e-24 : f32
    %4 = vector.broadcast %cst_1 : f32 to vector<8x1xf32>
    %5 = arith.maximumf %3, %4 : vector<8x1xf32>
    %6 = math.rsqrt %5 : vector<8x1xf32>
    %7 = vector.broadcast %6 : vector<8x1xf32> to vector<8x32xf32>
    %8 = arith.mulf %0, %7 : vector<8x32xf32>
    %c0_2 = arith.constant 0 : index
    %c0_3 = arith.constant 0 : index
    %9 = vector.load %arg1[%c0_2, %c0_3] : memref<136x128xf32, #tpu.memory_space<vmem>>, vector<1x32xf32>
    %c1 = arith.constant 1 : index
    %c0_4 = arith.constant 0 : index
    %10 = vector.load %arg1[%c1, %c0_4] : memref<136x128xf32, #tpu.memory_space<vmem>>, vector<1x32xf32>
    %11 = vector.broadcast %9 : vector<1x32xf32> to vector<8x32xf32>
    %12 = arith.mulf %0, %11 : vector<8x32xf32>
    %13 = vector.broadcast %10 : vector<1x32xf32> to vector<8x32xf32>
    %14 = arith.addf %12, %13 : vector<8x32xf32>
    %c2 = arith.constant 2 : index
    %c0_5 = arith.constant 0 : index
    %15 = vector.load %arg1[%c2, %c0_5] : memref<136x128xf32, #tpu.memory_space<vmem>>, vector<1x64xf32>
    %c4 = arith.constant 4 : index
    %c0_6 = arith.constant 0 : index
    %16 = vector.load %arg1[%c4, %c0_6] : memref<136x128xf32, #tpu.memory_space<vmem>>, vector<1x32xf32>
    %c40 = arith.constant 40 : index
    %c0_7 = arith.constant 0 : index
    %17 = vector.load %arg1[%c40, %c0_7] : memref<136x128xf32, #tpu.memory_space<vmem>>, vector<32x64xf32>
    %c72 = arith.constant 72 : index
    %c0_8 = arith.constant 0 : index
    %18 = vector.load %arg1[%c72, %c0_8] : memref<136x128xf32, #tpu.memory_space<vmem>>, vector<64x32xf32>
    %cst_9 = arith.constant dense<0.000000e+00> : vector<8x64xf32>
    %19 = tpu.matmul %14, %17, %cst_9 {dimension_numbers = #tpu.dot_dimension_numbers<[1], [0], [0], [1], [0, 0, 1, 1], [], []>} : vector<8x32xf32>, vector<32x64xf32>, vector<8x64xf32> -> vector<8x64xf32>
    %20 = vector.broadcast %15 : vector<1x64xf32> to vector<8x64xf32>
    %21 = arith.addf %19, %20 : vector<8x64xf32>
    %cst_10 = arith.constant 0.000000e+00 : f32
    %22 = vector.broadcast %cst_10 : f32 to vector<8x64xf32>
    %23 = arith.maximumf %21, %22 : vector<8x64xf32>
    %cst_11 = arith.constant dense<0.000000e+00> : vector<8x32xf32>
    %24 = tpu.matmul %23, %18, %cst_11 {dimension_numbers = #tpu.dot_dimension_numbers<[1], [0], [0], [1], [0, 0, 1, 1], [], []>} : vector<8x64xf32>, vector<64x32xf32>, vector<8x32xf32> -> vector<8x32xf32>
    %25 = vector.broadcast %16 : vector<1x32xf32> to vector<8x32xf32>
    %26 = arith.addf %24, %25 : vector<8x32xf32>
    %27 = arith.addf %14, %26 : vector<8x32xf32>
    %cst_12 = arith.constant 0.000000e+00 : f32
    %28 = vector.broadcast %cst_12 : f32 to vector<8x32xf32>
    %29 = arith.maximumf %27, %28 : vector<8x32xf32>
    %c3 = arith.constant 3 : index
    %c0_13 = arith.constant 0 : index
    %30 = vector.load %arg1[%c3, %c0_13] : memref<136x128xf32, #tpu.memory_space<vmem>>, vector<1x64xf32>
    %c5 = arith.constant 5 : index
    %c0_14 = arith.constant 0 : index
    %31 = vector.load %arg1[%c5, %c0_14] : memref<136x128xf32, #tpu.memory_space<vmem>>, vector<1x32xf32>
    %c40_15 = arith.constant 40 : index
    %c64 = arith.constant 64 : index
    %32 = vector.load %arg1[%c40_15, %c64] : memref<136x128xf32, #tpu.memory_space<vmem>>, vector<32x64xf32>
    %c72_16 = arith.constant 72 : index
    %c32 = arith.constant 32 : index
    %33 = vector.load %arg1[%c72_16, %c32] : memref<136x128xf32, #tpu.memory_space<vmem>>, vector<64x32xf32>
    %cst_17 = arith.constant dense<0.000000e+00> : vector<8x64xf32>
    %34 = tpu.matmul %29, %32, %cst_17 {dimension_numbers = #tpu.dot_dimension_numbers<[1], [0], [0], [1], [0, 0, 1, 1], [], []>} : vector<8x32xf32>, vector<32x64xf32>, vector<8x64xf32> -> vector<8x64xf32>
    %35 = vector.broadcast %30 : vector<1x64xf32> to vector<8x64xf32>
    %36 = arith.addf %34, %35 : vector<8x64xf32>
    %cst_18 = arith.constant 0.000000e+00 : f32
    %37 = vector.broadcast %cst_18 : f32 to vector<8x64xf32>
    %38 = arith.maximumf %36, %37 : vector<8x64xf32>
    %cst_19 = arith.constant dense<0.000000e+00> : vector<8x32xf32>
    %39 = tpu.matmul %38, %33, %cst_19 {dimension_numbers = #tpu.dot_dimension_numbers<[1], [0], [0], [1], [0, 0, 1, 1], [], []>} : vector<8x64xf32>, vector<64x32xf32>, vector<8x32xf32> -> vector<8x32xf32>
    %40 = vector.broadcast %31 : vector<1x32xf32> to vector<8x32xf32>
    %41 = arith.addf %39, %40 : vector<8x32xf32>
    %42 = arith.addf %29, %41 : vector<8x32xf32>
    %cst_20 = arith.constant 0.000000e+00 : f32
    %43 = vector.broadcast %cst_20 : f32 to vector<8x32xf32>
    %44 = arith.maximumf %42, %43 : vector<8x32xf32>
    %c8 = arith.constant 8 : index
    %c0_21 = arith.constant 0 : index
    %45 = vector.load %arg1[%c8, %c0_21] : memref<136x128xf32, #tpu.memory_space<vmem>>, vector<32x128xf32>
    %c6 = arith.constant 6 : index
    %c0_22 = arith.constant 0 : index
    %46 = vector.load %arg1[%c6, %c0_22] : memref<136x128xf32, #tpu.memory_space<vmem>>, vector<1x128xf32>
    %cst_23 = arith.constant dense<0.000000e+00> : vector<8x128xf32>
    %47 = tpu.matmul %44, %45, %cst_23 {dimension_numbers = #tpu.dot_dimension_numbers<[1], [0], [0], [1], [0, 0, 1, 1], [], []>} : vector<8x32xf32>, vector<32x128xf32>, vector<8x128xf32> -> vector<8x128xf32>
    %48 = vector.broadcast %46 : vector<1x128xf32> to vector<8x128xf32>
    %49 = arith.addf %47, %48 : vector<8x128xf32>
    %50 = tpu.iota {dimensions = array<i32: 1>} : vector<8x128xi32>
    %c4_i32 = arith.constant 4 : i32
    %51 = vector.broadcast %c4_i32 : i32 to vector<8x128xi32>
    %52 = arith.cmpi slt, %50, %51 : vector<8x128xi32>
    %cst_24 = arith.constant 0xFF800000 : f32
    %53 = vector.broadcast %cst_24 : f32 to vector<8x128xf32>
    %54 = arith.select %52, %49, %53 : vector<8x128xi1>, vector<8x128xf32>
    %cst_25 = arith.constant dense<0xFF800000> : vector<8xf32>
    %55 = vector.multi_reduction <maximumf>, %54, %cst_25 [1] : vector<8x128xf32> to vector<8xf32>
    %56 = vector.shape_cast %55 : vector<8xf32> to vector<8x1xf32>
    %57 = vector.broadcast %56 : vector<8x1xf32> to vector<8x128xf32>
    %58 = arith.cmpf oeq, %54, %57 : vector<8x128xf32>
    %c128_i32 = arith.constant 128 : i32
    %59 = vector.broadcast %c128_i32 : i32 to vector<8x128xi32>
    %60 = arith.select %58, %50, %59 : vector<8x128xi1>, vector<8x128xi32>
    %cst_26 = arith.constant dense<2147483647> : vector<8xi32>
    %61 = vector.multi_reduction <minsi>, %60, %cst_26 [1] : vector<8x128xi32> to vector<8xi32>
    %62 = vector.shape_cast %61 : vector<8xi32> to vector<8x1xi32>
    %cst_27 = arith.constant 0.000000e+00 : f32
    %63 = vector.broadcast %cst_27 : f32 to vector<24x128xf32>
    %c0_28 = arith.constant 0 : index
    %c0_29 = arith.constant 0 : index
    %64 = vector.load %arg2[%c0_28, %c0_29] : memref<24x128xf32, #tpu.memory_space<vmem>>, vector<24x128xf32>
    tpu.vector_store %arg2[%c0_28, %c0_29], %63 {strides = array<i32>} : memref<24x128xf32, #tpu.memory_space<vmem>>, vector<24x128xf32>,
    %c0_30 = arith.constant 0 : index
    %c0_31 = arith.constant 0 : index
    %65 = vector.load %arg2[%c0_30, %c0_31] : memref<24x128xf32, #tpu.memory_space<vmem>>, vector<8x32xf32>
    tpu.vector_store %arg2[%c0_30, %c0_31], %8 {strides = array<i32>} : memref<24x128xf32, #tpu.memory_space<vmem>>, vector<8x32xf32>,
    %c8_32 = arith.constant 8 : index
    %c0_33 = arith.constant 0 : index
    %66 = vector.load %arg2[%c8_32, %c0_33] : memref<24x128xf32, #tpu.memory_space<vmem>>, vector<8x128xf32>
    tpu.vector_store %arg2[%c8_32, %c0_33], %49 {strides = array<i32>} : memref<24x128xf32, #tpu.memory_space<vmem>>, vector<8x128xf32>,
    %67 = arith.sitofp %62 : vector<8x1xi32> to vector<8x1xf32>
    %c16 = arith.constant 16 : index
    %c0_34 = arith.constant 0 : index
    %68 = vector.load %arg2[%c16, %c0_34] : memref<24x128xf32, #tpu.memory_space<vmem>>, vector<8x1xf32>
    tpu.vector_store %arg2[%c16, %c0_34], %67 {strides = array<i32>} : memref<24x128xf32, #tpu.memory_space<vmem>>, vector<8x1xf32>,
    return
  }
}

</mosaic_0001>

<llo_original>
// kernel: tpu_custom_call.1
$region0: #{tpu_custom_call.1}
  #allocation0 [shape = 'u32[]', space=smem, size = 0x4, offset = 0x4, fixed_abs, tag = 'smem constant byte address 0x4 - core index']
  #allocation1 [shape = 'u32[72,128]{1,0:T(1,128)}', space=vmem, size = 0x9000, scoped, tag = 'internal scratch']
  %s0 = inlined_call_operand.hbm [shape: f32[8,32], index: 0, kind: input, shape index: {}]
  %s1 = inlined_call_operand.hbm [shape: f32[136,128], index: 1, kind: input, shape index: {}]
  %s2 = inlined_call_operand.hbm [shape: f32[24,128], index: 2, kind: output, shape index: {}]
  %s3 = sld [smem:[#allocation0]]
  $region26: #{tpu_custom_call.1} parent=0
    _
  %s5 = ssub.s32 1, %s3
  %s6 = scalar_select 0, %s5, %s3
  $region1: #{tpu_custom_call.1} parent=0
    #allocation2 [shape = 'u8[4096]{0}', space=vmem, size = 0x1000, scoped, tag = 'input window, operand 0, single buffered']
    #allocation3 [shape = 's32[1]{0}', space=sflag, size = 0x4, scoped, tag = 'scoped memory for tpu_custom_call.1']
    #allocation4 [shape = 's32[1]{0}', space=sflag, size = 0x4, scoped, tag = 'scoped memory for tpu_custom_call.1']
    #allocation5 [shape = 'u8[69632]{0}', space=vmem, size = 0x11000, scoped, tag = 'input window, operand 1, single buffered']
    #allocation6 [shape = 's32[1]{0}', space=sflag, size = 0x4, scoped, tag = 'scoped memory for tpu_custom_call.1']
    #allocation7 [shape = 'u8[12288]{0}', space=vmem, size = 0x3000, scoped, tag = 'output window, operand 0, single buffered']
    %7 = vsyncpa [#allocation3], 0
    %8 = vsyncpa [#allocation6], 0
    %9 = vsyncpa [#allocation4], 0
    // Predicated region
    $region2: #{tpu_custom_call.1} parent=1 // pred_check
      _
    $region3: #{tpu_custom_call.1} parent=1 // pred_check_branch
      %11 = sbr.rel (0) target = $region5
    $region4: #{tpu_custom_call.1} parent=1 // pred_region
      %13 = vsyncadd [#allocation3], 0
      %s15 = sshll.u32 %s0, 4
      %s16 = int_to_ptr.hbm [resolvable:$true] %s15
      %s17 = sshll.u32 [#allocation2], 4
      %s18 = int_to_ptr.vmem [resolvable:$true] %s17
      %20 = dma.hbm_to_vmem [thread:$0]  %s16, 128, %s18, [#allocation3]
    $region5: #{tpu_custom_call.1} parent=1 // pred_fallthru
      _
    // Predicated region
    $region6: #{tpu_custom_call.1} parent=1 // pred_check
      _
    $region7: #{tpu_custom_call.1} parent=1 // pred_check_branch
      %22 = sbr.rel (0) target = $region9
    $region8: #{tpu_custom_call.1} parent=1 // pred_region
      %24 = vsyncadd [#allocation6], 0
      %s25 = sshll.u32 %s1, 4
      %s26 = int_to_ptr.hbm [resolvable:$true] %s25
      %s27 = sshll.u32 [#allocation5], 4
      %s28 = int_to_ptr.vmem [resolvable:$true] %s27
      %33 = dma.hbm_to_vmem [thread:$0]  %s26, 2176, %s28, [#allocation6], 128, 128, 8
    $region9: #{tpu_custom_call.1} parent=1 // pred_fallthru
      _
    // Predicated region
    $region10: #{tpu_custom_call.1} parent=1 // pred_check
      _
    $region11: #{tpu_custom_call.1} parent=1 // pred_check_branch
      %35 = sbr.rel (0) target = $region13
    $region12: #{tpu_custom_call.1} parent=1 // pred_region
      %37 = dma.done [#allocation3], 128
    $region13: #{tpu_custom_call.1} parent=1 // pred_fallthru
      _
    // Predicated region
    $region14: #{tpu_custom_call.1} parent=1 // pred_check
      _
    $region15: #{tpu_custom_call.1} parent=1 // pred_check_branch
      %39 = sbr.rel (0) target = $region17
    $region16: #{tpu_custom_call.1} parent=1 // pred_region
      %41 = dma.done [#allocation6], 2176
    $region17: #{tpu_custom_call.1} parent=1 // pred_fallthru
      _
    %v42 = vld [vmem:[#allocation2] sm:$0xff]
    %v43 = vmul.f32 %v42, %v42
    %vm44 = vcmask 261120
    %v45 = vsel %vm44, %v43, 0.0
    %46 = vadd.xlane.f32.xlu0 %v45
    %v47 = vpop.xlane.xlu0 %46
    %v48 = vmax.f32 %v47, 1e-24
    %v49 = vrsqrt.pop %v48
    %v50 = vmul.f32 %v49, %v48
    %v51 = vmul.f32 %v50, %v49
    %v52 = vmul.f32 0.5, %v51
    %v53 = vsub.f32 1.5, %v52
    %v54 = vmul.f32 %v49, %v53
    %vm55 = vweird.f32 %v48
    %vm56 = vweird.f32 %v49
    %vm57 = vmor %vm55, %vm56
    %v58 = vsel %vm57, %v49, %v54
    %v59 = vmul.f32 %v42, %v58
    %v60 = vld [vmem:[#allocation5] sm:$0x1]
    %v61 = vld [vmem:[#allocation5 + $0x1] sm:$0x1]
    %v62 = vperm.slane %v60, 0
    %v63 = vmul.f32 %v42, %v62
    %v64 = vperm.slane %v61, 0
    %v65 = vadd.f32 %v63, %v64
    %v66 = vld [vmem:[#allocation5 + $0x2] sm:$0x1]
    %v67 = vld [vmem:[#allocation5 + $0x4] sm:$0x1]
    %v68 = vld [vmem:[#allocation5 + $0x28] sm:$0xff]
    %v69 = vld [vmem:[#allocation5 + $0x30] sm:$0xff]
    %v70 = vld [vmem:[#allocation5 + $0x38] sm:$0xff]
    %v71 = vld [vmem:[#allocation5 + $0x40] sm:$0xff]
    %v72 = vld [vmem:[#allocation5 + $0x48] sm:$0xff]
    %v73 = vld [vmem:[#allocation5 + $0x50] sm:$0xff]
    %v74 = vld [vmem:[#allocation5 + $0x58] sm:$0xff]
    %v75 = vld [vmem:[#allocation5 + $0x60] sm:$0xff]
    %v76 = vld [vmem:[#allocation5 + $0x68] sm:$0xff]
    %v77 = vld [vmem:[#allocation5 + $0x70] sm:$0xff]
    %v78 = vld [vmem:[#allocation5 + $0x78] sm:$0xff]
    %v79 = vld [vmem:[#allocation5 + $0x80] sm:$0xff]
    %v80 = vperm.slane %v66, 0
    %v82 = vsel %vm44, %v65, 0
    %84 = vmatpush.msra.mxu0 0.0
    %85 = vmatpush.msra.mxu0 0.0
    %86 = vmatpush.msra.mxu0 0.0
    %87 = vmatpush.msra.mxu0 0.0
    %88 = vmatpush.msra.mxu0 0.0
    %89 = vmatpush.msra.mxu0 0.0
    %90 = vmatpush.msra.mxu0 0.0
    %91 = vmatpush.msra.mxu0 0.0
    %92 = vmatpush.msra.mxu0 0.0
    %93 = vmatpush.msra.mxu0 0.0
    %94 = vmatpush.msra.mxu0 0.0
    %95 = vmatpush.msra.mxu0 0.0
    %96 = vmatpush.msra.mxu0 %v71
    %97 = vmatpush.msra.mxu0 %v70
    %98 = vmatpush.msra.mxu0 %v69
    %99 = vmatpush.msra.mxu0 %v68
    %100 = vmatmul.f32.gmra.mxu0 %v82
    %v101 = vpop.f32.mrf.mxu0
    %v102 = vadd.f32 %v80, %v101
    %103 = vdwg.mxu0
    %v104 = vmax.f32 %v102, 0.0
    %v105 = vperm.slane %v67, 0
    %vm106 = vcmask 523264
    %v108 = vsel %vm106, %v104, 0
    %110 = vmatpush.msra.mxu0 0.0
    %111 = vmatpush.msra.mxu0 0.0
    %112 = vmatpush.msra.mxu0 0.0
    %113 = vmatpush.msra.mxu0 0.0
    %114 = vmatpush.msra.mxu0 0.0
    %115 = vmatpush.msra.mxu0 0.0
    %116 = vmatpush.msra.mxu0 0.0
    %117 = vmatpush.msra.mxu0 0.0
    %118 = vmatpush.msra.mxu0 %v79
    %119 = vmatpush.msra.mxu0 %v78
    %120 = vmatpush.msra.mxu0 %v77
    %121 = vmatpush.msra.mxu0 %v76
    %122 = vmatpush.msra.mxu0 %v75
    %123 = vmatpush.msra.mxu0 %v74
    %124 = vmatpush.msra.mxu0 %v73
    %125 = vmatpush.msra.mxu0 %v72
    %126 = vmatmul.f32.gmra.mxu0 %v108
    %v127 = vpop.f32.mrf.mxu0
    %v128 = vadd.f32 %v105, %v127
    %129 = vdwg.mxu0
    %v130 = vadd.f32 %v65, %v128
    %v131 = vmax.f32 %v130, 0.0
    %v132 = vld [vmem:[#allocation5 + $0x3] sm:$0x1]
    %v133 = vld [vmem:[#allocation5 + $0x5] sm:$0x1]
    %v134 = vperm.slane %v132, 0
    %139 = vrot.lane.b32.xlu0 %v68, 64
    %v140 = vpop.permute.xlu0 %139
    %141 = vrot.lane.b32.xlu0 %v69, 64
    %v142 = vpop.permute.xlu0 %141
    %143 = vrot.lane.b32.xlu0 %v70, 64
    %v144 = vpop.permute.xlu0 %143
    %145 = vrot.lane.b32.xlu0 %v71, 64
    %v146 = vpop.permute.xlu0 %145
    %v152 = vsel %vm44, %v131, 0
    %154 = vmatpush.msra.mxu0 0.0
    %155 = vmatpush.msra.mxu0 0.0
    %156 = vmatpush.msra.mxu0 0.0
    %157 = vmatpush.msra.mxu0 0.0
    %158 = vmatpush.msra.mxu0 0.0
    %159 = vmatpush.msra.mxu0 0.0
    %160 = vmatpush.msra.mxu0 0.0
    %161 = vmatpush.msra.mxu0 0.0
    %162 = vmatpush.msra.mxu0 0.0
    %163 = vmatpush.msra.mxu0 0.0
    %164 = vmatpush.msra.mxu0 0.0
    %165 = vmatpush.msra.mxu0 0.0
    %166 = vmatpush.msra.mxu0 %v146
    %167 = vmatpush.msra.mxu0 %v144
    %168 = vmatpush.msra.mxu0 %v142
    %169 = vmatpush.msra.mxu0 %v140
    %170 = vmatmul.f32.gmra.mxu0 %v152
    %v171 = vpop.f32.mrf.mxu0
    %v172 = vadd.f32 %v134, %v171
    %173 = vdwg.mxu0
    %v174 = vmax.f32 %v172, 0.0
    %v175 = vperm.slane %v133, 0
    %184 = vrot.lane.b32.xlu0 %v72, 96
    %v185 = vpop.permute.xlu0 %184
    %186 = vrot.lane.b32.xlu0 %v73, 96
    %v187 = vpop.permute.xlu0 %186
    %188 = vrot.lane.b32.xlu0 %v74, 96
    %v189 = vpop.permute.xlu0 %188
    %190 = vrot.lane.b32.xlu0 %v75, 96
    %v191 = vpop.permute.xlu0 %190
    %192 = vrot.lane.b32.xlu0 %v76, 96
    %v193 = vpop.permute.xlu0 %192
    %194 = vrot.lane.b32.xlu0 %v77, 96
    %v195 = vpop.permute.xlu0 %194
    %196 = vrot.lane.b32.xlu0 %v78, 96
    %v197 = vpop.permute.xlu0 %196
    %198 = vrot.lane.b32.xlu0 %v79, 96
    %v199 = vpop.permute.xlu0 %198
    %v209 = vsel %vm106, %v174, 0
    %211 = vmatpush.msra.mxu0 0.0
    %212 = vmatpush.msra.mxu0 0.0
    %213 = vmatpush.msra.mxu0 0.0
    %214 = vmatpush.msra.mxu0 0.0
    %215 = vmatpush.msra.mxu0 0.0
    %216 = vmatpush.msra.mxu0 0.0
    %217 = vmatpush.msra.mxu0 0.0
    %218 = vmatpush.msra.mxu0 0.0
    %219 = vmatpush.msra.mxu0 %v199
    %220 = vmatpush.msra.mxu0 %v197
    %221 = vmatpush.msra.mxu0 %v195
    %222 = vmatpush.msra.mxu0 %v193
    %223 = vmatpush.msra.mxu0 %v191
    %224 = vmatpush.msra.mxu0 %v189
    %225 = vmatpush.msra.mxu0 %v187
    %226 = vmatpush.msra.mxu0 %v185
    %227 = vmatmul.f32.gmra.mxu0 %v209
    %v228 = vpop.f32.mrf.mxu0
    %v229 = vadd.f32 %v175, %v228
    %230 = vdwg.mxu0
    %v231 = vadd.f32 %v131, %v229
    %v232 = vmax.f32 %v231, 0.0
    %v233 = vld [vmem:[#allocation5 + $0x8] sm:$0xff]
    %v234 = vld [vmem:[#allocation5 + $0x10] sm:$0xff]
    %v235 = vld [vmem:[#allocation5 + $0x18] sm:$0xff]
    %v236 = vld [vmem:[#allocation5 + $0x20] sm:$0xff]
    %v237 = vld [vmem:[#allocation5 + $0x6] sm:$0x1]
    %v238 = vperm.slane %v237, 0
    %v240 = vsel %vm44, %v232, 0
    %242 = vmatpush.msra.mxu0 0.0
    %243 = vmatpush.msra.mxu0 0.0
    %244 = vmatpush.msra.mxu0 0.0
    %245 = vmatpush.msra.mxu0 0.0
    %246 = vmatpush.msra.mxu0 0.0
    %247 = vmatpush.msra.mxu0 0.0
    %248 = vmatpush.msra.mxu0 0.0
    %249 = vmatpush.msra.mxu0 0.0
    %250 = vmatpush.msra.mxu0 0.0
    %251 = vmatpush.msra.mxu0 0.0
    %252 = vmatpush.msra.mxu0 0.0
    %253 = vmatpush.msra.mxu0 0.0
    %254 = vmatpush.msra.mxu0 %v236
    %255 = vmatpush.msra.mxu0 %v235
    %256 = vmatpush.msra.mxu0 %v234
    %257 = vmatpush.msra.mxu0 %v233
    %258 = vmatmul.f32.gmra.mxu0 %v240
    %v259 = vpop.f32.mrf.mxu0
    %v260 = vadd.f32 %v238, %v259
    %261 = vdwg.mxu0
    %v262 = vlaneseq
    %v263 = vand.u32 %v262, 127
    %vm264 = vcmp.lt.s32.totalorder %v263, 4
    %v265 = vsel %vm264, %v260, -inf
    %266 = vmax.xlane.f32.xlu0 %v265
    %v267 = vpop.xlane.xlu0 %266
    %vm268 = vcmp.eq.f32.partialorder %v265, %v267
    %v269 = vsel %vm268, %v263, 128
    %v270 = vand.u32 %v269, 65535
    %v271 = vshra.s32 %v269, 16
    %v272 = vcvt.s32.f32 %v270
    %v273 = vcvt.s32.f32 %v271
    %274 = vmin.xlane.f32.xlu0 %v273
    %v275 = vpop.xlane.xlu0 %274
    %vm276 = vcmp.eq.f32.partialorder %v273, %v275
    %v277 = vsel %vm276, %v272, inf
    %278 = vmin.xlane.f32.xlu0 %v277
    %v279 = vpop.xlane.xlu0 %278
    %v280 = vcvt.f32.s32 %v279
    %v281 = vcvt.f32.s32 %v275
    %v282 = vshll.u32 %v281, 16
    %v283 = vadd.s32 %v282, %v280
    %284 = vst [vmem:[#allocation7] sm:$0xff] 0.0
    %285 = vst [vmem:[#allocation7 + $0x8] sm:$0xff] 0.0
    %286 = vst [vmem:[#allocation7 + $0x10] sm:$0xff] 0.0
    %287 = vst.msk [vmem:[#allocation7] sm:$0xff] %vm44, %v59
    %288 = vst [vmem:[#allocation7 + $0x8] sm:$0xff] %v260
    %v289 = vcvt.s32.f32 %v283
    %vm290 = vcmask 7168
    %291 = vst.msk [vmem:[#allocation7 + $0x10] sm:$0xff] %vm290, %v289
    // Predicated region
    $region18: #{tpu_custom_call.1} parent=1 // pred_check
      _
    $region19: #{tpu_custom_call.1} parent=1 // pred_check_branch
      %293 = sbr.rel (0) target = $region21
    $region20: #{tpu_custom_call.1} parent=1 // pred_region
      %295 = vsyncadd [#allocation4], 0
      %s296 = sshll.u32 [#allocation7], 4
      %s297 = int_to_ptr.vmem [resolvable:$true] %s296
      %s298 = sshll.u32 %s2, 4
      %s299 = int_to_ptr.hbm [resolvable:$true] %s298
      %304 = dma.vmem_to_hbm [thread:$0]  %s297, 384, %s299, [#allocation4], 128, 128, 8
    $region21: #{tpu_custom_call.1} parent=1 // pred_fallthru
      _
    // Predicated region
    $region22: #{tpu_custom_call.1} parent=1 // pred_check
      _
    $region23: #{tpu_custom_call.1} parent=1 // pred_check_branch
      %306 = sbr.rel (0) target = $region25
    $region24: #{tpu_custom_call.1} parent=1 // pred_region
      %308 = dma.done [#allocation4], 384
    $region25: #{tpu_custom_call.1} parent=1 // pred_fallthru
      _
    %309 = vsyncpa [#allocation3], 1
    %310 = vsyncpa [#allocation6], 1
    %311 = vsyncpa [#allocation4], 1

</llo_original>
